<compile_context>
chip_gen: v7x
topology: tpu7x:2x2x1
jax: 0.10.0
libtpu: 0.0.40
codegen_flags: <defaults>
</compile_context>

<pallas_src>
import jax
import jax.numpy as jnp
from jax.experimental import pallas as pl
from jax.experimental.pallas import tpu as pltpu

LANE = 128
SUBLANE_BF16 = 16   # bf16 vreg packs (16, 128); keep batch tiles multiples of 16


def _round_up(x, m):
    return (x + m - 1) // m * m


# --------------------------------------------------------------------------
# Kernels: one batch tile per grid step, all weights resident in VMEM.
# --------------------------------------------------------------------------
def model_res_kernel(x_ref, w1_ref, b1_ref, w2_ref, b2_ref,
                     w3_ref, b3_ref, w4_ref, b4_ref, o_ref):
    bf16 = jnp.bfloat16
    x = x_ref[...]                                                 # (TB, F) bf16

    # dense1 (BN1 pre-folded) + ReLU
    x1 = jnp.maximum(
        jnp.dot(x, w1_ref[...], preferred_element_type=jnp.float32) + b1_ref[...],
        0.0).astype(bf16)                                          # (TB, H)

    # dense2 (BN2 pre-folded) + ReLU        (dropout = identity in eval)
    x2 = jnp.maximum(
        jnp.dot(x1, w2_ref[...], preferred_element_type=jnp.float32) + b2_ref[...],
        0.0).astype(bf16)                                          # (TB, H)

    # dense3 (BN3 pre-folded)               (dropout = identity in eval)
    x3 = jnp.dot(x2, w3_ref[...], preferred_element_type=jnp.float32) + b3_ref[...]

    # dense4(x1 + x3); output columns zero-padded to a lane-dense width
    y = (x1.astype(jnp.float32) + x3).astype(bf16)
    o_ref[...] = (jnp.dot(y, w4_ref[...], preferred_element_type=jnp.float32)
                  + b4_ref[...]).astype(o_ref.dtype)


def model_res_kernel_fused34(x_ref, w1_ref, b1_ref, w2_ref, b2_ref,
                             w4_ref, w34_ref, b34_ref, o_ref):
    # dense4(x1 + dense3(x2)) == x1 @ W4 + x2 @ (W3 @ W4) + (b3 @ W4 + b4)
    bf16 = jnp.bfloat16
    x = x_ref[...]
    x1 = jnp.maximum(
        jnp.dot(x, w1_ref[...], preferred_element_type=jnp.float32) + b1_ref[...],
        0.0).astype(bf16)
    x2 = jnp.maximum(
        jnp.dot(x1, w2_ref[...], preferred_element_type=jnp.float32) + b2_ref[...],
        0.0).astype(bf16)
    y = (jnp.dot(x1, w4_ref[...], preferred_element_type=jnp.float32)
         + jnp.dot(x2, w34_ref[...], preferred_element_type=jnp.float32)
         + b34_ref[...])
    o_ref[...] = y.astype(o_ref.dtype)


# --------------------------------------------------------------------------
# Parameter folding (weight_norm + eval-mode BatchNorm) -- outside the kernel.
# --------------------------------------------------------------------------
def weight_norm_effective(v, g, eps=1e-12):
    """nn.utils.weight_norm (dim=0): W[i,:] = g[i] * v[i,:] / ||v[i,:]||."""
    norm = jnp.sqrt(jnp.sum(v * v, axis=1, keepdims=True) + eps)
    return g * v / norm


def bn_fold(gamma, beta, mean, var, eps=1e-5):
    """Eval-mode BatchNorm1d as y = x * scale + shift."""
    scale = gamma / jnp.sqrt(var + eps)
    shift = beta - mean * scale
    return scale, shift


def prepare_kernel_params(p, num_targets):
    """Fold weight_norm + BN; bf16 weights; padded lane-dense output weights."""
    def linear_wt(d):
        w = weight_norm_effective(d["v"], d["g"])      # (out, in)
        return w.T, d["b"].reshape(1, -1)              # (in, out), (1, out)

    def fold_bn(bn, wb):
        w, b = wb
        scale, shift = bn_fold(bn["gamma"], bn["beta"], bn["mean"], bn["var"])
        return scale[:, None] * w, b + shift[None, :] @ w

    w1, b1 = fold_bn(p["bn1"], linear_wt(p["dense1"]))
    w2, b2 = fold_bn(p["bn2"], linear_wt(p["dense2"]))
    w3, b3 = fold_bn(p["bn3"], linear_wt(p["dense3"]))
    w4, b4 = linear_wt(p["dense4"])

    H = w1.shape[1]
    t_pad = _round_up(max(num_targets, 1), LANE)

    def pad_cols(a):
        out = jnp.zeros((a.shape[0], t_pad), jnp.float32)
        return out.at[:, :a.shape[1]].set(a)

    bf16 = jnp.bfloat16
    kp = dict(num_targets=num_targets, hidden=H, t_pad=t_pad,
              w1=w1.astype(bf16), b1=b1,
              w2=w2.astype(bf16), b2=b2)

    fused = t_pad < H      # fold dense3 into dense4 only when it saves MXU work
    kp["fused"] = fused
    if fused:
        w34 = w3 @ w4                       # (H, T) formed in f32 (exact algebra)
        b34 = b3 @ w4 + b4                  # (1, T)
        kp["w4"] = pad_cols(w4).astype(bf16)
        kp["w34"] = pad_cols(w34).astype(bf16)
        kp["b34"] = pad_cols(b34)
    else:
        kp["w3"] = w3.astype(bf16)
        kp["b3"] = b3
        kp["w4"] = pad_cols(w4).astype(bf16)
        kp["b4"] = pad_cols(b4)
    return kp


# --------------------------------------------------------------------------
# Wrapper: batch-tiled grid, resident single-buffered weights, parallel axis.
# --------------------------------------------------------------------------
def model_res_forward(x, kp, *, block_b=1024, single_buffer_weights=True):
    B, F = x.shape
    H = kp["hidden"]
    Tp = kp["t_pad"]
    num_targets = kp["num_targets"]

    if kp["fused"]:
        kernel = model_res_kernel_fused34
        weight_keys = ("w1", "b1", "w2", "b2", "w4", "w34", "b34")
        tail_flops = 2 * H * Tp
    else:
        kernel = model_res_kernel
        weight_keys = ("w1", "b1", "w2", "b2", "w3", "b3", "w4", "b4")
        tail_flops = H * H + H * Tp
    weights = [kp[k] for k in weight_keys]

    # Batch tile: multiples of 16 (bf16 sublane packing); at least 2 grid steps
    # when the batch is tall enough so v7x's second TensorCore gets work.
    B16 = _round_up(B, SUBLANE_BF16)
    if B16 <= SUBLANE_BF16:
        TB = B16
    else:
        TB = min(block_b, _round_up(pl.cdiv(B16, 2), SUBLANE_BF16))
    B_pad = _round_up(B16, TB)
    grid = (B_pad // TB,)

    xb = x.astype(jnp.bfloat16)            # bf16 activation stream (halves DMA)
    if B_pad != B:
        xb = jnp.pad(xb, ((0, B_pad - B), (0, 0)))

    # Cost estimate (scheduling hint for XLA).
    flops = 2 * B_pad * (F * H + H * H + tail_flops)
    weight_bytes = sum(int(w.size) * w.dtype.itemsize for w in weights)
    bytes_accessed = int(xb.size) * 2 + B_pad * Tp * 2 + weight_bytes
    cost = pl.CostEstimate(flops=flops, transcendentals=0,
                           bytes_accessed=bytes_accessed)

    # VMEM budget: double-buffered x/out tiles + resident weights + live f32
    # activation tiles, with headroom; capped at ~75% of physical VMEM.
    tile_bytes = TB * F * 2 + TB * Tp * 2
    act_bytes = 4 * TB * H * 4
    vmem_needed = 2 * tile_bytes + 2 * weight_bytes + act_bytes
    try:
        vmem_cap = int(pltpu.get_tpu_info().vmem_capacity_bytes)
    except Exception:
        vmem_cap = 64 * 2**20
    vmem_limit = int(min(vmem_cap * 3 // 4, max(32 * 2**20, 4 * vmem_needed)))

    def build(single_buffer):
        def resident(arr):
            # Same block every grid step -> stays VMEM-resident across iterations;
            # single-buffered (no per-step weight DMA / no wasted 2nd buffer).
            if single_buffer:
                return pl.BlockSpec(arr.shape, lambda i: (0, 0),
                                    pipeline_mode=pl.Buffered(1))
            return pl.BlockSpec(arr.shape, lambda i: (0, 0))

        in_specs = ([pl.BlockSpec((TB, F), lambda i: (i, 0))]
                    + [resident(w) for w in weights])
        out_specs = pl.BlockSpec((TB, Tp), lambda i: (i, 0))
        return pl.pallas_call(
            kernel,
            out_shape=jax.ShapeDtypeStruct((B_pad, Tp), jnp.bfloat16),
            grid_spec=pltpu.PrefetchScalarGridSpec(
                num_scalar_prefetch=0, grid=grid,
                in_specs=in_specs, out_specs=out_specs),
            compiler_params=pltpu.CompilerParams(
                dimension_semantics=("parallel",),
                vmem_limit_bytes=vmem_limit),
            cost_estimate=cost,
        )

    try:
        out = jax.block_until_ready(build(single_buffer_weights)(xb, *weights))
    except Exception:
        # Fallback: default double-buffered weight specs (correct, more VMEM).
        out = jax.block_until_ready(build(False)(xb, *weights))

    return out[:B, :num_targets].astype(jnp.float32)


# --------------------------------------------------------------------------
# Synthetic parameters (torch-style raw params) + references.
# --------------------------------------------------------------------------
def make_params(key, num_features, hidden_size, num_targets):
    ks = iter(jax.random.split(key, 24))

    def bn(n):
        return dict(
            gamma=jax.random.uniform(next(ks), (n,), jnp.float32, 0.5, 1.5),
            beta=jax.random.normal(next(ks), (n,), jnp.float32) * 0.1,
            mean=jax.random.normal(next(ks), (n,), jnp.float32) * 0.1,
            var=jax.random.uniform(next(ks), (n,), jnp.float32, 0.5, 1.5),
        )

    def dense(fan_in, fan_out):
        return dict(
            v=jax.random.normal(next(ks), (fan_out, fan_in), jnp.float32) * 0.1,
            g=jax.random.uniform(next(ks), (fan_out, 1), jnp.float32, 0.5, 1.5),
            b=jax.random.normal(next(ks), (fan_out,), jnp.float32) * 0.01,
        )

    return dict(
        bn1=bn(num_features), dense1=dense(num_features, hidden_size),
        bn2=bn(hidden_size), dense2=dense(hidden_size, hidden_size),
        bn3=bn(hidden_size), dense3=dense(hidden_size, hidden_size),
        dense4=dense(hidden_size, num_targets),
    )


def model_res_reference_f32(x, p):
    """Unfolded full-f32 reference matching the PyTorch module in eval mode."""
    def bn(v, q):
        s, t = bn_fold(q["gamma"], q["beta"], q["mean"], q["var"])
        return v * s[None, :] + t[None, :]

    def dense(v, d):
        w = weight_norm_effective(d["v"], d["g"])
        return v @ w.T + d["b"][None, :]

    x1 = jnp.maximum(dense(bn(x, p["bn1"]), p["dense1"]), 0.0)
    x2 = jnp.maximum(dense(bn(x1, p["bn2"]), p["dense2"]), 0.0)
    x3 = dense(bn(x2, p["bn3"]), p["dense3"])
    return dense(x1 + x3, p["dense4"])


def model_res_reference_folded_bf16(x, kp):
    """Same folded / bf16-stream arithmetic as the kernel (strict check)."""
    bf16 = jnp.bfloat16

    def dot(a, w):
        return jnp.dot(a, w, preferred_element_type=jnp.float32)

    xb = x.astype(bf16)
    x1 = jnp.maximum(dot(xb, kp["w1"]) + kp["b1"], 0.0).astype(bf16)
    x2 = jnp.maximum(dot(x1, kp["w2"]) + kp["b2"], 0.0).astype(bf16)
    if kp["fused"]:
        y = dot(x1, kp["w4"]) + dot(x2, kp["w34"]) + kp["b34"]
    else:
        x3 = dot(x2, kp["w3"]) + kp["b3"]
        y = dot((x1.astype(jnp.float32) + x3).astype(bf16), kp["w4"]) + kp["b4"]
    y = y.astype(bf16).astype(jnp.float32)
    return y[:, :kp["num_targets"]]


if __name__ == "__main__":
    key = jax.random.PRNGKey(0)
    k_x1, k_p1, k_x2, k_p2 = jax.random.split(key, 4)

    # ---- Config 1: tiny shapes; padded targets (128) >= hidden -> residual kernel.
    batch, num_features, hidden_size, num_targets = 8, 32, 32, 8
    x = jax.random.normal(k_x1, (batch, num_features), jnp.float32)
    params = make_params(k_p1, num_features, hidden_size, num_targets)
    kparams = prepare_kernel_params(params, num_targets)
    assert not kparams["fused"]

    out = model_res_forward(x, kparams)
    jax.block_until_ready(out)
    assert out.shape == (batch, num_targets)
    # Strict: matches the kernel's own (folded, bf16-stream) arithmetic up to ~1 bf16 ulp.
    ref_exact = model_res_reference_folded_bf16(x, kparams)
    assert jnp.allclose(out, ref_exact, atol=1e-2, rtol=1e-2), "cfg1: mismatch vs folded ref"
    # Semantic: matches the original f32 module up to bf16 rounding.
    ref_f32 = model_res_reference_f32(x, params)
    assert jnp.allclose(out, ref_f32, atol=5e-2, rtol=5e-2), "cfg1: mismatch vs f32 ref"

    # ---- Config 2: hidden > padded targets -> exercises the dense3->dense4 fold.
    hidden2 = 256
    x_b = jax.random.normal(k_x2, (batch, num_features), jnp.float32)
    params2 = make_params(k_p2, num_features, hidden2, num_targets)
    kparams2 = prepare_kernel_params(params2, num_targets)
    assert kparams2["fused"]

    out2 = model_res_forward(x_b, kparams2)
    jax.block_until_ready(out2)
    assert out2.shape == (batch, num_targets)
    ref2_exact = model_res_reference_folded_bf16(x_b, kparams2)
    assert jnp.allclose(out2, ref2_exact, atol=1e-2, rtol=1e-2), "cfg2: mismatch vs folded ref"
    ref2_f32 = model_res_reference_f32(x_b, params2)
    assert jnp.allclose(out2, ref2_f32, atol=6e-2, rtol=6e-2), "cfg2: mismatch vs f32 ref"

    print("KERNEL_OK")
</pallas_src>

<mosaic_0001>
module attributes {stable_mosaic.version = 11 : i64} {
  func.func @model_res_kernel(%arg0: i32, %arg1: memref<16x32xbf16, #tpu.memory_space<vmem>>, %arg2: memref<32x32xbf16, #tpu.memory_space<vmem>>, %arg3: memref<1x32xf32, #tpu.memory_space<vmem>>, %arg4: memref<32x32xbf16, #tpu.memory_space<vmem>>, %arg5: memref<1x32xf32, #tpu.memory_space<vmem>>, %arg6: memref<32x32xbf16, #tpu.memory_space<vmem>>, %arg7: memref<1x32xf32, #tpu.memory_space<vmem>>, %arg8: memref<32x128xbf16, #tpu.memory_space<vmem>>, %arg9: memref<1x128xf32, #tpu.memory_space<vmem>>, %arg10: memref<16x128xbf16, #tpu.memory_space<vmem>>) attributes {dimension_semantics = [#tpu.dimension_semantics<parallel>], iteration_bounds = array<i64: 1>, scalar_prefetch = 0 : i64, scratch_operands = 0 : i64, tpu.core_type = #tpu.core_type<tc>, window_params = [{transform_indices = @transform_0, window_bounds = array<i64: 16, 32>}, {pipeline_mode = #tpu.pipeline_mode<synchronous>, transform_indices = @transform_1, window_bounds = array<i64: 32, 32>}, {pipeline_mode = #tpu.pipeline_mode<synchronous>, transform_indices = @transform_2, window_bounds = array<i64: 1, 32>}, {pipeline_mode = #tpu.pipeline_mode<synchronous>, transform_indices = @transform_3, window_bounds = array<i64: 32, 32>}, {pipeline_mode = #tpu.pipeline_mode<synchronous>, transform_indices = @transform_4, window_bounds = array<i64: 1, 32>}, {pipeline_mode = #tpu.pipeline_mode<synchronous>, transform_indices = @transform_5, window_bounds = array<i64: 32, 32>}, {pipeline_mode = #tpu.pipeline_mode<synchronous>, transform_indices = @transform_6, window_bounds = array<i64: 1, 32>}, {pipeline_mode = #tpu.pipeline_mode<synchronous>, transform_indices = @transform_7, window_bounds = array<i64: 32, 128>}, {pipeline_mode = #tpu.pipeline_mode<synchronous>, transform_indices = @transform_8, window_bounds = array<i64: 1, 128>}, {transform_indices = @transform_9, window_bounds = array<i64: 16, 128>}]} {
    %c0 = arith.constant 0 : index
    %c0_0 = arith.constant 0 : index
    %0 = vector.load %arg1[%c0, %c0_0] : memref<16x32xbf16, #tpu.memory_space<vmem>>, vector<16x32xbf16>
    %c0_1 = arith.constant 0 : index
    %c0_2 = arith.constant 0 : index
    %1 = vector.load %arg2[%c0_1, %c0_2] : memref<32x32xbf16, #tpu.memory_space<vmem>>, vector<32x32xbf16>
    %cst = arith.constant dense<0.000000e+00> : vector<16x32xf32>
    %2 = tpu.matmul %0, %1, %cst {dimension_numbers = #tpu.dot_dimension_numbers<[1], [0], [0], [1], [0, 0, 1, 1], [], []>} : vector<16x32xbf16>, vector<32x32xbf16>, vector<16x32xf32> -> vector<16x32xf32>
    %c0_3 = arith.constant 0 : index
    %c0_4 = arith.constant 0 : index
    %3 = vector.load %arg3[%c0_3, %c0_4] : memref<1x32xf32, #tpu.memory_space<vmem>>, vector<1x32xf32>
    %4 = vector.broadcast %3 : vector<1x32xf32> to vector<16x32xf32>
    %5 = arith.addf %2, %4 : vector<16x32xf32>
    %cst_5 = arith.constant 0.000000e+00 : f32
    %6 = vector.broadcast %cst_5 : f32 to vector<16x32xf32>
    %7 = arith.maximumf %5, %6 : vector<16x32xf32>
    %8 = arith.truncf %7 : vector<16x32xf32> to vector<16x32xbf16>
    %c0_6 = arith.constant 0 : index
    %c0_7 = arith.constant 0 : index
    %9 = vector.load %arg4[%c0_6, %c0_7] : memref<32x32xbf16, #tpu.memory_space<vmem>>, vector<32x32xbf16>
    %cst_8 = arith.constant dense<0.000000e+00> : vector<16x32xf32>
    %10 = tpu.matmul %8, %9, %cst_8 {dimension_numbers = #tpu.dot_dimension_numbers<[1], [0], [0], [1], [0, 0, 1, 1], [], []>} : vector<16x32xbf16>, vector<32x32xbf16>, vector<16x32xf32> -> vector<16x32xf32>
    %c0_9 = arith.constant 0 : index
    %c0_10 = arith.constant 0 : index
    %11 = vector.load %arg5[%c0_9, %c0_10] : memref<1x32xf32, #tpu.memory_space<vmem>>, vector<1x32xf32>
    %12 = vector.broadcast %11 : vector<1x32xf32> to vector<16x32xf32>
    %13 = arith.addf %10, %12 : vector<16x32xf32>
    %cst_11 = arith.constant 0.000000e+00 : f32
    %14 = vector.broadcast %cst_11 : f32 to vector<16x32xf32>
    %15 = arith.maximumf %13, %14 : vector<16x32xf32>
    %16 = arith.truncf %15 : vector<16x32xf32> to vector<16x32xbf16>
    %c0_12 = arith.constant 0 : index
    %c0_13 = arith.constant 0 : index
    %17 = vector.load %arg6[%c0_12, %c0_13] : memref<32x32xbf16, #tpu.memory_space<vmem>>, vector<32x32xbf16>
    %cst_14 = arith.constant dense<0.000000e+00> : vector<16x32xf32>
    %18 = tpu.matmul %16, %17, %cst_14 {dimension_numbers = #tpu.dot_dimension_numbers<[1], [0], [0], [1], [0, 0, 1, 1], [], []>} : vector<16x32xbf16>, vector<32x32xbf16>, vector<16x32xf32> -> vector<16x32xf32>
    %c0_15 = arith.constant 0 : index
    %c0_16 = arith.constant 0 : index
    %19 = vector.load %arg7[%c0_15, %c0_16] : memref<1x32xf32, #tpu.memory_space<vmem>>, vector<1x32xf32>
    %20 = vector.broadcast %19 : vector<1x32xf32> to vector<16x32xf32>
    %21 = arith.addf %18, %20 : vector<16x32xf32>
    %22 = arith.extf %8 : vector<16x32xbf16> to vector<16x32xf32>
    %23 = arith.addf %22, %21 : vector<16x32xf32>
    %24 = arith.truncf %23 : vector<16x32xf32> to vector<16x32xbf16>
    %c0_17 = arith.constant 0 : index
    %c0_18 = arith.constant 0 : index
    %25 = vector.load %arg8[%c0_17, %c0_18] : memref<32x128xbf16, #tpu.memory_space<vmem>>, vector<32x128xbf16>
    %cst_19 = arith.constant dense<0.000000e+00> : vector<16x128xf32>
    %26 = tpu.matmul %24, %25, %cst_19 {dimension_numbers = #tpu.dot_dimension_numbers<[1], [0], [0], [1], [0, 0, 1, 1], [], []>} : vector<16x32xbf16>, vector<32x128xbf16>, vector<16x128xf32> -> vector<16x128xf32>
    %c0_20 = arith.constant 0 : index
    %c0_21 = arith.constant 0 : index
    %27 = vector.load %arg9[%c0_20, %c0_21] : memref<1x128xf32, #tpu.memory_space<vmem>>, vector<1x128xf32>
    %28 = vector.broadcast %27 : vector<1x128xf32> to vector<16x128xf32>
    %29 = arith.addf %26, %28 : vector<16x128xf32>
    %30 = arith.truncf %29 : vector<16x128xf32> to vector<16x128xbf16>
    %c0_22 = arith.constant 0 : index
    %c0_23 = arith.constant 0 : index
    %31 = vector.load %arg10[%c0_22, %c0_23] : memref<16x128xbf16, #tpu.memory_space<vmem>>, vector<16x128xbf16>
    tpu.vector_store %arg10[%c0_22, %c0_23], %30 {strides = array<i32>} : memref<16x128xbf16, #tpu.memory_space<vmem>>, vector<16x128xbf16>,
    return
  }
  func.func @transform_0(%arg0: i32) -> (i32, i32) {
    %c0_i32 = arith.constant 0 : i32
    %c0_i32_0 = arith.constant 0 : i32
    return %arg0, %c0_i32 : i32, i32
  }
  func.func @transform_1(%arg0: i32) -> (i32, i32) {
    %c0_i32 = arith.constant 0 : i32
    %c0_i32_0 = arith.constant 0 : i32
    %c0_i32_1 = arith.constant 0 : i32
    return %c0_i32, %c0_i32_0 : i32, i32
  }
  func.func @transform_2(%arg0: i32) -> (i32, i32) {
    %c0_i32 = arith.constant 0 : i32
    %c0_i32_0 = arith.constant 0 : i32
    %c0_i32_1 = arith.constant 0 : i32
    return %c0_i32, %c0_i32_0 : i32, i32
  }
  func.func @transform_3(%arg0: i32) -> (i32, i32) {
    %c0_i32 = arith.constant 0 : i32
    %c0_i32_0 = arith.constant 0 : i32
    %c0_i32_1 = arith.constant 0 : i32
    return %c0_i32, %c0_i32_0 : i32, i32
  }
  func.func @transform_4(%arg0: i32) -> (i32, i32) {
    %c0_i32 = arith.constant 0 : i32
    %c0_i32_0 = arith.constant 0 : i32
    %c0_i32_1 = arith.constant 0 : i32
    return %c0_i32, %c0_i32_0 : i32, i32
  }
  func.func @transform_5(%arg0: i32) -> (i32, i32) {
    %c0_i32 = arith.constant 0 : i32
    %c0_i32_0 = arith.constant 0 : i32
    %c0_i32_1 = arith.constant 0 : i32
    return %c0_i32, %c0_i32_0 : i32, i32
  }
  func.func @transform_6(%arg0: i32) -> (i32, i32) {
    %c0_i32 = arith.constant 0 : i32
    %c0_i32_0 = arith.constant 0 : i32
    %c0_i32_1 = arith.constant 0 : i32
    return %c0_i32, %c0_i32_0 : i32, i32
  }
  func.func @transform_7(%arg0: i32) -> (i32, i32) {
    %c0_i32 = arith.constant 0 : i32
    %c0_i32_0 = arith.constant 0 : i32
    %c0_i32_1 = arith.constant 0 : i32
    return %c0_i32, %c0_i32_0 : i32, i32
  }
  func.func @transform_8(%arg0: i32) -> (i32, i32) {
    %c0_i32 = arith.constant 0 : i32
    %c0_i32_0 = arith.constant 0 : i32
    %c0_i32_1 = arith.constant 0 : i32
    return %c0_i32, %c0_i32_0 : i32, i32
  }
  func.func @transform_9(%arg0: i32) -> (i32, i32) {
    %c0_i32 = arith.constant 0 : i32
    %c0_i32_0 = arith.constant 0 : i32
    return %arg0, %c0_i32 : i32, i32
  }
}

module attributes {stable_mosaic.version = 11 : i64} {
  func.func @model_res_kernel(%arg0: i32, %arg1: memref<16x32xbf16, #tpu.memory_space<vmem>>, %arg2: memref<32x32xbf16, #tpu.memory_space<vmem>>, %arg3: memref<1x32xf32, #tpu.memory_space<vmem>>, %arg4: memref<32x32xbf16, #tpu.memory_space<vmem>>, %arg5: memref<1x32xf32, #tpu.memory_space<vmem>>, %arg6: memref<32x32xbf16, #tpu.memory_space<vmem>>, %arg7: memref<1x32xf32, #tpu.memory_space<vmem>>, %arg8: memref<32x128xbf16, #tpu.memory_space<vmem>>, %arg9: memref<1x128xf32, #tpu.memory_space<vmem>>, %arg10: memref<16x128xbf16, #tpu.memory_space<vmem>>) attributes {dimension_semantics = [#tpu.dimension_semantics<parallel>], iteration_bounds = array<i64: 1>, scalar_prefetch = 0 : i64, scratch_operands = 0 : i64, tpu.core_type = #tpu.core_type<tc>, window_params = [{transform_indices = @transform_0, window_bounds = array<i64: 16, 32>}, {pipeline_mode = #tpu.pipeline_mode<synchronous>, transform_indices = @transform_1, window_bounds = array<i64: 32, 32>}, {pipeline_mode = #tpu.pipeline_mode<synchronous>, transform_indices = @transform_2, window_bounds = array<i64: 1, 32>}, {pipeline_mode = #tpu.pipeline_mode<synchronous>, transform_indices = @transform_3, window_bounds = array<i64: 32, 32>}, {pipeline_mode = #tpu.pipeline_mode<synchronous>, transform_indices = @transform_4, window_bounds = array<i64: 1, 32>}, {pipeline_mode = #tpu.pipeline_mode<synchronous>, transform_indices = @transform_5, window_bounds = array<i64: 32, 32>}, {pipeline_mode = #tpu.pipeline_mode<synchronous>, transform_indices = @transform_6, window_bounds = array<i64: 1, 32>}, {pipeline_mode = #tpu.pipeline_mode<synchronous>, transform_indices = @transform_7, window_bounds = array<i64: 32, 128>}, {pipeline_mode = #tpu.pipeline_mode<synchronous>, transform_indices = @transform_8, window_bounds = array<i64: 1, 128>}, {transform_indices = @transform_9, window_bounds = array<i64: 16, 128>}]} {
    %c0 = arith.constant 0 : index
    %c0_0 = arith.constant 0 : index
    %0 = vector.load %arg1[%c0, %c0_0] : memref<16x32xbf16, #tpu.memory_space<vmem>>, vector<16x32xbf16>
    %c0_1 = arith.constant 0 : index
    %c0_2 = arith.constant 0 : index
    %1 = vector.load %arg2[%c0_1, %c0_2] : memref<32x32xbf16, #tpu.memory_space<vmem>>, vector<32x32xbf16>
    %cst = arith.constant dense<0.000000e+00> : vector<16x32xf32>
    %2 = tpu.matmul %0, %1, %cst {dimension_numbers = #tpu.dot_dimension_numbers<[1], [0], [0], [1], [0, 0, 1, 1], [], []>} : vector<16x32xbf16>, vector<32x32xbf16>, vector<16x32xf32> -> vector<16x32xf32>
    %c0_3 = arith.constant 0 : index
    %c0_4 = arith.constant 0 : index
    %3 = vector.load %arg3[%c0_3, %c0_4] : memref<1x32xf32, #tpu.memory_space<vmem>>, vector<1x32xf32>
    %4 = vector.broadcast %3 : vector<1x32xf32> to vector<16x32xf32>
    %5 = arith.addf %2, %4 : vector<16x32xf32>
    %cst_5 = arith.constant 0.000000e+00 : f32
    %6 = vector.broadcast %cst_5 : f32 to vector<16x32xf32>
    %7 = arith.maximumf %5, %6 : vector<16x32xf32>
    %8 = arith.truncf %7 : vector<16x32xf32> to vector<16x32xbf16>
    %c0_6 = arith.constant 0 : index
    %c0_7 = arith.constant 0 : index
    %9 = vector.load %arg4[%c0_6, %c0_7] : memref<32x32xbf16, #tpu.memory_space<vmem>>, vector<32x32xbf16>
    %cst_8 = arith.constant dense<0.000000e+00> : vector<16x32xf32>
    %10 = tpu.matmul %8, %9, %cst_8 {dimension_numbers = #tpu.dot_dimension_numbers<[1], [0], [0], [1], [0, 0, 1, 1], [], []>} : vector<16x32xbf16>, vector<32x32xbf16>, vector<16x32xf32> -> vector<16x32xf32>
    %c0_9 = arith.constant 0 : index
    %c0_10 = arith.constant 0 : index
    %11 = vector.load %arg5[%c0_9, %c0_10] : memref<1x32xf32, #tpu.memory_space<vmem>>, vector<1x32xf32>
    %12 = vector.broadcast %11 : vector<1x32xf32> to vector<16x32xf32>
    %13 = arith.addf %10, %12 : vector<16x32xf32>
    %cst_11 = arith.constant 0.000000e+00 : f32
    %14 = vector.broadcast %cst_11 : f32 to vector<16x32xf32>
    %15 = arith.maximumf %13, %14 : vector<16x32xf32>
    %16 = arith.truncf %15 : vector<16x32xf32> to vector<16x32xbf16>
    %c0_12 = arith.constant 0 : index
    %c0_13 = arith.constant 0 : index
    %17 = vector.load %arg6[%c0_12, %c0_13] : memref<32x32xbf16, #tpu.memory_space<vmem>>, vector<32x32xbf16>
    %cst_14 = arith.constant dense<0.000000e+00> : vector<16x32xf32>
    %18 = tpu.matmul %16, %17, %cst_14 {dimension_numbers = #tpu.dot_dimension_numbers<[1], [0], [0], [1], [0, 0, 1, 1], [], []>} : vector<16x32xbf16>, vector<32x32xbf16>, vector<16x32xf32> -> vector<16x32xf32>
    %c0_15 = arith.constant 0 : index
    %c0_16 = arith.constant 0 : index
    %19 = vector.load %arg7[%c0_15, %c0_16] : memref<1x32xf32, #tpu.memory_space<vmem>>, vector<1x32xf32>
    %20 = vector.broadcast %19 : vector<1x32xf32> to vector<16x32xf32>
    %21 = arith.addf %18, %20 : vector<16x32xf32>
    %22 = arith.extf %8 : vector<16x32xbf16> to vector<16x32xf32>
    %23 = arith.addf %22, %21 : vector<16x32xf32>
    %24 = arith.truncf %23 : vector<16x32xf32> to vector<16x32xbf16>
    %c0_17 = arith.constant 0 : index
    %c0_18 = arith.constant 0 : index
    %25 = vector.load %arg8[%c0_17, %c0_18] : memref<32x128xbf16, #tpu.memory_space<vmem>>, vector<32x128xbf16>
    %cst_19 = arith.constant dense<0.000000e+00> : vector<16x128xf32>
    %26 = tpu.matmul %24, %25, %cst_19 {dimension_numbers = #tpu.dot_dimension_numbers<[1], [0], [0], [1], [0, 0, 1, 1], [], []>} : vector<16x32xbf16>, vector<32x128xbf16>, vector<16x128xf32> -> vector<16x128xf32>
    %c0_20 = arith.constant 0 : index
    %c0_21 = arith.constant 0 : index
    %27 = vector.load %arg9[%c0_20, %c0_21] : memref<1x128xf32, #tpu.memory_space<vmem>>, vector<1x128xf32>
    %28 = vector.broadcast %27 : vector<1x128xf32> to vector<16x128xf32>
    %29 = arith.addf %26, %28 : vector<16x128xf32>
    %30 = arith.truncf %29 : vector<16x128xf32> to vector<16x128xbf16>
    %c0_22 = arith.constant 0 : index
    %c0_23 = arith.constant 0 : index
    %31 = vector.load %arg10[%c0_22, %c0_23] : memref<16x128xbf16, #tpu.memory_space<vmem>>, vector<16x128xbf16>
    tpu.vector_store %arg10[%c0_22, %c0_23], %30 {strides = array<i32>} : memref<16x128xbf16, #tpu.memory_space<vmem>>, vector<16x128xbf16>,
    return
  }
  func.func @transform_0(%arg0: i32) -> (i32, i32) {
    %c0_i32 = arith.constant 0 : i32
    %c0_i32_0 = arith.constant 0 : i32
    return %arg0, %c0_i32 : i32, i32
  }
  func.func @transform_1(%arg0: i32) -> (i32, i32) {
    %c0_i32 = arith.constant 0 : i32
    %c0_i32_0 = arith.constant 0 : i32
    %c0_i32_1 = arith.constant 0 : i32
    return %c0_i32, %c0_i32_0 : i32, i32
  }
  func.func @transform_2(%arg0: i32) -> (i32, i32) {
    %c0_i32 = arith.constant 0 : i32
    %c0_i32_0 = arith.constant 0 : i32
    %c0_i32_1 = arith.constant 0 : i32
    return %c0_i32, %c0_i32_0 : i32, i32
  }
  func.func @transform_3(%arg0: i32) -> (i32, i32) {
    %c0_i32 = arith.constant 0 : i32
    %c0_i32_0 = arith.constant 0 : i32
    %c0_i32_1 = arith.constant 0 : i32
    return %c0_i32, %c0_i32_0 : i32, i32
  }
  func.func @transform_4(%arg0: i32) -> (i32, i32) {
    %c0_i32 = arith.constant 0 : i32
    %c0_i32_0 = arith.constant 0 : i32
    %c0_i32_1 = arith.constant 0 : i32
    return %c0_i32, %c0_i32_0 : i32, i32
  }
  func.func @transform_5(%arg0: i32) -> (i32, i32) {
    %c0_i32 = arith.constant 0 : i32
    %c0_i32_0 = arith.constant 0 : i32
    %c0_i32_1 = arith.constant 0 : i32
    return %c0_i32, %c0_i32_0 : i32, i32
  }
  func.func @transform_6(%arg0: i32) -> (i32, i32) {
    %c0_i32 = arith.constant 0 : i32
    %c0_i32_0 = arith.constant 0 : i32
    %c0_i32_1 = arith.constant 0 : i32
    return %c0_i32, %c0_i32_0 : i32, i32
  }
  func.func @transform_7(%arg0: i32) -> (i32, i32) {
    %c0_i32 = arith.constant 0 : i32
    %c0_i32_0 = arith.constant 0 : i32
    %c0_i32_1 = arith.constant 0 : i32
    return %c0_i32, %c0_i32_0 : i32, i32
  }
  func.func @transform_8(%arg0: i32) -> (i32, i32) {
    %c0_i32 = arith.constant 0 : i32
    %c0_i32_0 = arith.constant 0 : i32
    %c0_i32_1 = arith.constant 0 : i32
    return %c0_i32, %c0_i32_0 : i32, i32
  }
  func.func @transform_9(%arg0: i32) -> (i32, i32) {
    %c0_i32 = arith.constant 0 : i32
    %c0_i32_0 = arith.constant 0 : i32
    return %arg0, %c0_i32 : i32, i32
  }
}

</mosaic_0001>

<llo_original>
// kernel: tpu_custom_call.1
$region0: #{tpu_custom_call.1}
  #allocation0 [shape = 'u32[]', space=smem, size = 0x4, offset = 0x4, fixed_abs, tag = 'smem constant byte address 0x4 - core index']
  #allocation1 [shape = 'u32[144,128]{1,0:T(1,128)}', space=vmem, size = 0x12000, scoped, tag = 'internal scratch']
  %s0 = inlined_call_operand.hbm [shape: bf16[16,32], index: 0, kind: input, shape index: {}]
  %s1 = inlined_call_operand.hbm [shape: bf16[32,32], index: 1, kind: input, shape index: {}]
  %s2 = inlined_call_operand.vmem [shape: f32[1,32], index: 2, kind: input, shape index: {}]
  %s3 = inlined_call_operand.hbm [shape: bf16[32,32], index: 3, kind: input, shape index: {}]
  %s4 = inlined_call_operand.vmem [shape: f32[1,32], index: 4, kind: input, shape index: {}]
  %s5 = inlined_call_operand.vmem [shape: bf16[32,32], index: 5, kind: input, shape index: {}]
  %s6 = inlined_call_operand.vmem [shape: f32[1,32], index: 6, kind: input, shape index: {}]
  %s7 = inlined_call_operand.hbm [shape: bf16[32,128], index: 7, kind: input, shape index: {}]
  %s8 = inlined_call_operand.vmem [shape: f32[1,128], index: 8, kind: input, shape index: {}]
  %s9 = inlined_call_operand.hbm [shape: bf16[16,128], index: 9, kind: output, shape index: {}]
  %s10 = sld [smem:[#allocation0]]
  $region62: #{tpu_custom_call.1} parent=0
    _
  %s12 = ssub.s32 1, %s10
  %s13 = scalar_select 0, %s12, %s10
  $region1: #{tpu_custom_call.1} parent=0
    #allocation2 [shape = 'u8[4096]{0}', space=vmem, size = 0x1000, scoped, tag = 'input window, operand 0, single buffered']
    #allocation3 [shape = 's32[1]{0}', space=sflag, size = 0x4, scoped, tag = 'scoped memory for tpu_custom_call.1']
    #allocation4 [shape = 's32[1]{0}', space=sflag, size = 0x4, scoped, tag = 'scoped memory for tpu_custom_call.1']
    #allocation5 [shape = 'u8[8192]{0}', space=vmem, size = 0x2000, scoped, tag = 'input window, operand 1, single buffered']
    #allocation6 [shape = 's32[1]{0}', space=sflag, size = 0x4, scoped, tag = 'scoped memory for tpu_custom_call.1']
    #allocation7 [shape = 'u8[8192]{0}', space=vmem, size = 0x2000, scoped, tag = 'input window, operand 3, single buffered']
    #allocation8 [shape = 'u8[8192]{0}', space=vmem, size = 0x2000, scoped, tag = 'input window, operand 7, single buffered']
    #allocation9 [shape = 's32[1]{0}', space=sflag, size = 0x4, scoped, tag = 'scoped memory for tpu_custom_call.1']
    #allocation10 [shape = 'u8[4096]{0}', space=vmem, size = 0x1000, scoped, tag = 'output window, operand 0, single buffered']
    %14 = vsyncpa [#allocation3], 0
    %15 = vsyncpa [#allocation6], 0
    %16 = vsyncpa [#allocation9], 0
    %17 = vsyncpa [#allocation4], 0
    // Predicated region
    $region2: #{tpu_custom_call.1} parent=1 // pred_check
      _
    $region3: #{tpu_custom_call.1} parent=1 // pred_check_branch
      %19 = sbr.rel (0) target = $region5
    $region4: #{tpu_custom_call.1} parent=1 // pred_region
      %s21 = ssub.s32 128, 128
      %22 = vsyncadd [#allocation3], %s21
      %s23 = sshll.u32 [#allocation2], 4
      %s24 = int_to_ptr.vmem [resolvable:$true] %s23
      %29 = dma.hbm_to_vmem [thread:$0]  %s0, 128, %s24, [#allocation3], 64, 64, 4
    $region5: #{tpu_custom_call.1} parent=1 // pred_fallthru
      _
    // Predicated region
    $region6: #{tpu_custom_call.1} parent=1 // pred_check
      _
    $region7: #{tpu_custom_call.1} parent=1 // pred_check_branch
      %31 = sbr.rel (0) target = $region9
    $region8: #{tpu_custom_call.1} parent=1 // pred_region
      %s33 = ssub.s32 256, 256
      %34 = vsyncadd [#allocation6], %s33
      %s35 = sshll.u32 [#allocation5], 4
      %s36 = int_to_ptr.vmem [resolvable:$true] %s35
      %41 = dma.hbm_to_vmem [thread:$0]  %s1, 256, %s36, [#allocation6], 64, 64, 4
    $region9: #{tpu_custom_call.1} parent=1 // pred_fallthru
      _
    // Predicated region
    $region10: #{tpu_custom_call.1} parent=1 // pred_check
      _
    $region11: #{tpu_custom_call.1} parent=1 // pred_check_branch
      %43 = sbr.rel (0) target = $region13
    $region12: #{tpu_custom_call.1} parent=1 // pred_region
      _
    $region13: #{tpu_custom_call.1} parent=1 // pred_fallthru
      _
    // Predicated region
    $region14: #{tpu_custom_call.1} parent=1 // pred_check
      _
    $region15: #{tpu_custom_call.1} parent=1 // pred_check_branch
      %45 = sbr.rel (0) target = $region17
    $region16: #{tpu_custom_call.1} parent=1 // pred_region
      %s47 = ssub.s32 256, 256
      %48 = vsyncadd [#allocation6], %s47
      %s49 = sshll.u32 [#allocation7], 4
      %s50 = int_to_ptr.vmem [resolvable:$true] %s49
      %55 = dma.hbm_to_vmem [thread:$0]  %s3, 256, %s50, [#allocation6], 64, 64, 4
    $region17: #{tpu_custom_call.1} parent=1 // pred_fallthru
      _
    // Predicated region
    $region18: #{tpu_custom_call.1} parent=1 // pred_check
      _
    $region19: #{tpu_custom_call.1} parent=1 // pred_check_branch
      %57 = sbr.rel (0) target = $region21
    $region20: #{tpu_custom_call.1} parent=1 // pred_region
      _
    $region21: #{tpu_custom_call.1} parent=1 // pred_fallthru
      _
    // Predicated region
    $region22: #{tpu_custom_call.1} parent=1 // pred_check
      _
    $region23: #{tpu_custom_call.1} parent=1 // pred_check_branch
      %59 = sbr.rel (0) target = $region25
    $region24: #{tpu_custom_call.1} parent=1 // pred_region
      _
    $region25: #{tpu_custom_call.1} parent=1 // pred_fallthru
      _
    // Predicated region
    $region26: #{tpu_custom_call.1} parent=1 // pred_check
      _
    $region27: #{tpu_custom_call.1} parent=1 // pred_check_branch
      %61 = sbr.rel (0) target = $region29
    $region28: #{tpu_custom_call.1} parent=1 // pred_region
      _
    $region29: #{tpu_custom_call.1} parent=1 // pred_fallthru
      _
    // Predicated region
    $region30: #{tpu_custom_call.1} parent=1 // pred_check
      _
    $region31: #{tpu_custom_call.1} parent=1 // pred_check_branch
      %63 = sbr.rel (0) target = $region33
    $region32: #{tpu_custom_call.1} parent=1 // pred_region
      %s65 = ssub.s32 256, 256
      %66 = vsyncadd [#allocation9], %s65
      %s67 = sshll.u32 [#allocation8], 4
      %s68 = int_to_ptr.vmem [resolvable:$true] %s67
      %73 = dma.hbm_to_vmem [thread:$0]  %s7, 256, %s68, [#allocation9], 64, 64, 4
    $region33: #{tpu_custom_call.1} parent=1 // pred_fallthru
      _
    // Predicated region
    $region34: #{tpu_custom_call.1} parent=1 // pred_check
      _
    $region35: #{tpu_custom_call.1} parent=1 // pred_check_branch
      %75 = sbr.rel (0) target = $region37
    $region36: #{tpu_custom_call.1} parent=1 // pred_region
      _
    $region37: #{tpu_custom_call.1} parent=1 // pred_fallthru
      _
    // Predicated region
    $region38: #{tpu_custom_call.1} parent=1 // pred_check
      _
    $region39: #{tpu_custom_call.1} parent=1 // pred_check_branch
      %77 = sbr.rel (0) target = $region41
    $region40: #{tpu_custom_call.1} parent=1 // pred_region
      %78 = dma.done [#allocation3], 128
    $region41: #{tpu_custom_call.1} parent=1 // pred_fallthru
      _
    // Predicated region
    $region42: #{tpu_custom_call.1} parent=1 // pred_check
      _
    $region43: #{tpu_custom_call.1} parent=1 // pred_check_branch
      %80 = sbr.rel (0) target = $region45
    $region44: #{tpu_custom_call.1} parent=1 // pred_region
      %81 = dma.done [#allocation6], 256
    $region45: #{tpu_custom_call.1} parent=1 // pred_fallthru
      _
    // Predicated region
    $region46: #{tpu_custom_call.1} parent=1 // pred_check
      _
    $region47: #{tpu_custom_call.1} parent=1 // pred_check_branch
      %83 = sbr.rel (0) target = $region49
    $region48: #{tpu_custom_call.1} parent=1 // pred_region
      %84 = dma.done [#allocation6], 256
    $region49: #{tpu_custom_call.1} parent=1 // pred_fallthru
      _
    // Predicated region
    $region50: #{tpu_custom_call.1} parent=1 // pred_check
      _
    $region51: #{tpu_custom_call.1} parent=1 // pred_check_branch
      %86 = sbr.rel (0) target = $region53
    $region52: #{tpu_custom_call.1} parent=1 // pred_region
      %87 = dma.done [#allocation9], 256
    $region53: #{tpu_custom_call.1} parent=1 // pred_fallthru
      _
    %v89 = vld [vmem:[#allocation2] sm:$0xf]
    %v90 = vld [vmem:[#allocation2 + $0x4] sm:$0xf]
    %v91 = vld [vmem:[#allocation5] sm:$0xf]
    %v92 = vld [vmem:[#allocation5 + $0x4] sm:$0xf]
    %v93 = vld [vmem:[#allocation5 + $0x8] sm:$0xf]
    %v94 = vld [vmem:[#allocation5 + $0xc] sm:$0xf]
    %v95 = vld [vmem:[%s2] sm:$0x1]
    %v97 = vlaneseq
    %v98 = vshrl.u32 %v97, 7
    %v99 = vsub.s32 0, %v98
    %v100 = vrot.slane %v95, %v99
    %v104 = vunpack.c.l.b16 %v89
    %v105 = vunpack.c.l.b16 %v90
    %v106 = vpack.c.b16 %v105, %v104
    %v111 = vunpack.c.l.b16 %v91
    %v112 = vunpack.c.l.b16 %v92
    %v113 = vunpack.c.l.b16 %v93
    %v114 = vunpack.c.l.b16 %v94
    %v115 = vpack.c.b16 %v112, %v111
    %v116 = vpack.c.b16 %v114, %v113
    %vm119 = vcmask 261120
    %v121 = vsel %vm119, %v106, 0
    %123 = vmatprep.subr.bf16.mxu0 0
    %124 = vmatpush1.bf16.msra.mxu0 %v115
    %125 = vmatprep.subr.bf16.mxu0 0
    %126 = vmatpush1.bf16.msra.mxu0 %v116
    %127 = vmatprep.subr.bf16.mxu0 0
    %128 = vmatpush1.bf16.msra.mxu0 0
    %129 = vmatprep.subr.bf16.mxu0 0
    %130 = vmatpush1.bf16.msra.mxu0 0
    %131 = vmatprep.subr.bf16.mxu0 0
    %132 = vmatpush1.bf16.msra.mxu0 0
    %133 = vmatprep.subr.bf16.mxu0 0
    %134 = vmatpush1.bf16.msra.mxu0 0
    %135 = vmatprep.subr.bf16.mxu0 0
    %136 = vmatpush1.bf16.msra.mxu0 0
    %137 = vmatprep.subr.bf16.mxu0 0
    %138 = vmatpush1.bf16.msra.mxu0 0
    %139 = vmatprep.subr.bf16.mxu0 0
    %140 = vmatpush1.bf16.msra.mxu0 0
    %141 = vmatprep.subr.bf16.mxu0 0
    %142 = vmatpush1.bf16.msra.mxu0 0
    %143 = vmatprep.subr.bf16.mxu0 0
    %144 = vmatpush1.bf16.msra.mxu0 0
    %145 = vmatprep.subr.bf16.mxu0 0
    %146 = vmatpush1.bf16.msra.mxu0 0
    %147 = vmatprep.subr.bf16.mxu0 0
    %148 = vmatpush1.bf16.msra.mxu0 0
    %149 = vmatprep.subr.bf16.mxu0 0
    %150 = vmatpush1.bf16.msra.mxu0 0
    %151 = vmatprep.subr.bf16.mxu0 0
    %152 = vmatpush1.bf16.msra.mxu0 0
    %153 = vmatprep.subr.bf16.mxu0 0
    %154 = vmatpush1.bf16.msra.mxu0 0
    %155 = vmatprep.mubr.bf16.mxu0 0
    %156 = vmatmul.mubr.bf16.gmra.mrb[0].mxu0 %v121
    %v157 = vpop.f32.mrb[0].mxu0
    %v158 = vadd.f32 %v100, %v157
    %v159 = vpop.f32.mrb[0].mxu0
    %v160 = vpop.f32.mrb[0].mxu0
    %v161 = vadd.f32 %v100, %v160
    %v162 = vpop.f32.mrb[0].mxu0
    %163 = vdwg.mxu0
    %v164 = vmax.f32 %v158, 0.0
    %v165 = vmax.f32 %v161, 0.0
    %v166 = vpack.c.bf16 %v165, %v164
    %v167 = vld [vmem:[#allocation7] sm:$0xf]
    %v168 = vld [vmem:[#allocation7 + $0x4] sm:$0xf]
    %v169 = vld [vmem:[#allocation7 + $0x8] sm:$0xf]
    %v170 = vld [vmem:[#allocation7 + $0xc] sm:$0xf]
    %v171 = vld [vmem:[%s4] sm:$0x1]
    %v173 = vlaneseq
    %v174 = vshrl.u32 %v173, 7
    %v175 = vsub.s32 0, %v174
    %v176 = vrot.slane %v171, %v175
    %v182 = vunpack.c.l.b16 %v167
    %v183 = vunpack.c.l.b16 %v168
    %v184 = vunpack.c.l.b16 %v169
    %v185 = vunpack.c.l.b16 %v170
    %v186 = vpack.c.b16 %v183, %v182
    %v187 = vpack.c.b16 %v185, %v184
    %v191 = vsel %vm119, %v166, 0
    %193 = vmatprep.subr.bf16.mxu0 0
    %194 = vmatpush1.bf16.msra.mxu0 %v186
    %195 = vmatprep.subr.bf16.mxu0 0
    %196 = vmatpush1.bf16.msra.mxu0 %v187
    %197 = vmatprep.subr.bf16.mxu0 0
    %198 = vmatpush1.bf16.msra.mxu0 0
    %199 = vmatprep.subr.bf16.mxu0 0
    %200 = vmatpush1.bf16.msra.mxu0 0
    %201 = vmatprep.subr.bf16.mxu0 0
    %202 = vmatpush1.bf16.msra.mxu0 0
    %203 = vmatprep.subr.bf16.mxu0 0
    %204 = vmatpush1.bf16.msra.mxu0 0
    %205 = vmatprep.subr.bf16.mxu0 0
    %206 = vmatpush1.bf16.msra.mxu0 0
    %207 = vmatprep.subr.bf16.mxu0 0
    %208 = vmatpush1.bf16.msra.mxu0 0
    %209 = vmatprep.subr.bf16.mxu0 0
    %210 = vmatpush1.bf16.msra.mxu0 0
    %211 = vmatprep.subr.bf16.mxu0 0
    %212 = vmatpush1.bf16.msra.mxu0 0
    %213 = vmatprep.subr.bf16.mxu0 0
    %214 = vmatpush1.bf16.msra.mxu0 0
    %215 = vmatprep.subr.bf16.mxu0 0
    %216 = vmatpush1.bf16.msra.mxu0 0
    %217 = vmatprep.subr.bf16.mxu0 0
    %218 = vmatpush1.bf16.msra.mxu0 0
    %219 = vmatprep.subr.bf16.mxu0 0
    %220 = vmatpush1.bf16.msra.mxu0 0
    %221 = vmatprep.subr.bf16.mxu0 0
    %222 = vmatpush1.bf16.msra.mxu0 0
    %223 = vmatprep.subr.bf16.mxu0 0
    %224 = vmatpush1.bf16.msra.mxu0 0
    %225 = vmatprep.mubr.bf16.mxu0 0
    %226 = vmatmul.mubr.bf16.gmra.mrb[0].mxu0 %v191
    %v227 = vpop.f32.mrb[0].mxu0
    %v228 = vadd.f32 %v176, %v227
    %v229 = vpop.f32.mrb[0].mxu0
    %v230 = vpop.f32.mrb[0].mxu0
    %v231 = vadd.f32 %v176, %v230
    %v232 = vpop.f32.mrb[0].mxu0
    %233 = vdwg.mxu0
    %v234 = vmax.f32 %v228, 0.0
    %v235 = vmax.f32 %v231, 0.0
    %v236 = vpack.c.bf16 %v235, %v234
    %v237 = vld [vmem:[%s5] sm:$0xf]
    %v238 = vld [vmem:[%s5 + $0x4] sm:$0xf]
    %v239 = vld [vmem:[%s5 + $0x8] sm:$0xf]
    %v240 = vld [vmem:[%s5 + $0xc] sm:$0xf]
    %v241 = vld [vmem:[%s6] sm:$0x1]
    %v243 = vlaneseq
    %v244 = vshrl.u32 %v243, 7
    %v245 = vsub.s32 0, %v244
    %v246 = vrot.slane %v241, %v245
    %v252 = vunpack.c.l.b16 %v237
    %v253 = vunpack.c.l.b16 %v238
    %v254 = vunpack.c.l.b16 %v239
    %v255 = vunpack.c.l.b16 %v240
    %v256 = vpack.c.b16 %v253, %v252
    %v257 = vpack.c.b16 %v255, %v254
    %v261 = vsel %vm119, %v236, 0
    %263 = vmatprep.subr.bf16.mxu0 0
    %264 = vmatpush1.bf16.msra.mxu0 %v256
    %265 = vmatprep.subr.bf16.mxu0 0
    %266 = vmatpush1.bf16.msra.mxu0 %v257
    %267 = vmatprep.subr.bf16.mxu0 0
    %268 = vmatpush1.bf16.msra.mxu0 0
    %269 = vmatprep.subr.bf16.mxu0 0
    %270 = vmatpush1.bf16.msra.mxu0 0
    %271 = vmatprep.subr.bf16.mxu0 0
    %272 = vmatpush1.bf16.msra.mxu0 0
    %273 = vmatprep.subr.bf16.mxu0 0
    %274 = vmatpush1.bf16.msra.mxu0 0
    %275 = vmatprep.subr.bf16.mxu0 0
    %276 = vmatpush1.bf16.msra.mxu0 0
    %277 = vmatprep.subr.bf16.mxu0 0
    %278 = vmatpush1.bf16.msra.mxu0 0
    %279 = vmatprep.subr.bf16.mxu0 0
    %280 = vmatpush1.bf16.msra.mxu0 0
    %281 = vmatprep.subr.bf16.mxu0 0
    %282 = vmatpush1.bf16.msra.mxu0 0
    %283 = vmatprep.subr.bf16.mxu0 0
    %284 = vmatpush1.bf16.msra.mxu0 0
    %285 = vmatprep.subr.bf16.mxu0 0
    %286 = vmatpush1.bf16.msra.mxu0 0
    %287 = vmatprep.subr.bf16.mxu0 0
    %288 = vmatpush1.bf16.msra.mxu0 0
    %289 = vmatprep.subr.bf16.mxu0 0
    %290 = vmatpush1.bf16.msra.mxu0 0
    %291 = vmatprep.subr.bf16.mxu0 0
    %292 = vmatpush1.bf16.msra.mxu0 0
    %293 = vmatprep.subr.bf16.mxu0 0
    %294 = vmatpush1.bf16.msra.mxu0 0
    %295 = vmatprep.mubr.bf16.mxu0 0
    %296 = vmatmul.mubr.bf16.gmra.mrb[0].mxu0 %v261
    %v297 = vpop.f32.mrb[0].mxu0
    %v298 = vadd.f32 %v246, %v297
    %v299 = vpop.f32.mrb[0].mxu0
    %v300 = vpop.f32.mrb[0].mxu0
    %v301 = vadd.f32 %v246, %v300
    %v302 = vpop.f32.mrb[0].mxu0
    %303 = vdwg.mxu0
    %v304 = vunpack.c.l.bf16 %v166
    %v305 = vunpack.c.h.bf16 %v166
    %v306 = vadd.f32 %v304, %v298
    %v307 = vadd.f32 %v305, %v301
    %v308 = vpack.c.bf16 %v307, %v306
    %v309 = vld [vmem:[#allocation8] sm:$0xf]
    %v310 = vld [vmem:[#allocation8 + $0x4] sm:$0xf]
    %v311 = vld [vmem:[#allocation8 + $0x8] sm:$0xf]
    %v312 = vld [vmem:[#allocation8 + $0xc] sm:$0xf]
    %v313 = vld [vmem:[%s8] sm:$0x1]
    %v315 = vlaneseq
    %v316 = vshrl.u32 %v315, 7
    %v317 = vsub.s32 0, %v316
    %v318 = vrot.slane %v313, %v317
    %v324 = vunpack.c.l.b16 %v309
    %v325 = vunpack.c.l.b16 %v310
    %v326 = vunpack.c.l.b16 %v311
    %v327 = vunpack.c.l.b16 %v312
    %v328 = vpack.c.b16 %v325, %v324
    %v329 = vpack.c.b16 %v327, %v326
    %v333 = vsel %vm119, %v308, 0
    %335 = vmatprep.subr.bf16.mxu0 0
    %336 = vmatpush1.bf16.msra.mxu0 %v328
    %337 = vmatprep.subr.bf16.mxu0 0
    %338 = vmatpush1.bf16.msra.mxu0 %v329
    %339 = vmatprep.subr.bf16.mxu0 0
    %340 = vmatpush1.bf16.msra.mxu0 0
    %341 = vmatprep.subr.bf16.mxu0 0
    %342 = vmatpush1.bf16.msra.mxu0 0
    %343 = vmatprep.subr.bf16.mxu0 0
    %344 = vmatpush1.bf16.msra.mxu0 0
    %345 = vmatprep.subr.bf16.mxu0 0
    %346 = vmatpush1.bf16.msra.mxu0 0
    %347 = vmatprep.subr.bf16.mxu0 0
    %348 = vmatpush1.bf16.msra.mxu0 0
    %349 = vmatprep.subr.bf16.mxu0 0
    %350 = vmatpush1.bf16.msra.mxu0 0
    %351 = vmatprep.subr.bf16.mxu0 0
    %352 = vmatpush1.bf16.msra.mxu0 0
    %353 = vmatprep.subr.bf16.mxu0 0
    %354 = vmatpush1.bf16.msra.mxu0 0
    %355 = vmatprep.subr.bf16.mxu0 0
    %356 = vmatpush1.bf16.msra.mxu0 0
    %357 = vmatprep.subr.bf16.mxu0 0
    %358 = vmatpush1.bf16.msra.mxu0 0
    %359 = vmatprep.subr.bf16.mxu0 0
    %360 = vmatpush1.bf16.msra.mxu0 0
    %361 = vmatprep.subr.bf16.mxu0 0
    %362 = vmatpush1.bf16.msra.mxu0 0
    %363 = vmatprep.subr.bf16.mxu0 0
    %364 = vmatpush1.bf16.msra.mxu0 0
    %365 = vmatprep.subr.bf16.mxu0 0
    %366 = vmatpush1.bf16.msra.mxu0 0
    %367 = vmatprep.mubr.bf16.mxu0 0
    %368 = vmatmul.mubr.bf16.gmra.mrb[0].mxu0 %v333
    %v369 = vpop.f32.mrb[0].mxu0
    %v370 = vadd.f32 %v318, %v369
    %v371 = vpop.f32.mrb[0].mxu0
    %v372 = vpop.f32.mrb[0].mxu0
    %v373 = vadd.f32 %v318, %v372
    %v374 = vpop.f32.mrb[0].mxu0
    %375 = vdwg.mxu0
    %v376 = vpack.c.bf16 %v373, %v370
    %v378 = vunpack.c.l.b16 %v376
    %v379 = vunpack.c.h.b16 %v376
    %v380 = vpack.c.b16 %v378, %v378
    %v381 = vpack.c.b16 %v379, %v379
    %384 = vst [vmem:[#allocation10] sm:$0xf] %v380
    %385 = vst [vmem:[#allocation10 + $0x4] sm:$0xf] %v381
    // Predicated region
    $region54: #{tpu_custom_call.1} parent=1 // pred_check
      _
    $region55: #{tpu_custom_call.1} parent=1 // pred_check_branch
      %387 = sbr.rel (0) target = $region57
    $region56: #{tpu_custom_call.1} parent=1 // pred_region
      %s389 = ssub.s32 128, 128
      %390 = vsyncadd [#allocation4], %s389
      %s391 = sshll.u32 [#allocation10], 4
      %s392 = int_to_ptr.vmem [resolvable:$true] %s391
      %397 = dma.vmem_to_hbm [thread:$0]  %s392, 128, %s9, [#allocation4], 64, 64, 4
    $region57: #{tpu_custom_call.1} parent=1 // pred_fallthru
      _
    // Predicated region
    $region58: #{tpu_custom_call.1} parent=1 // pred_check
      _
    $region59: #{tpu_custom_call.1} parent=1 // pred_check_branch
      %399 = sbr.rel (0) target = $region61
    $region60: #{tpu_custom_call.1} parent=1 // pred_region
      %400 = dma.done [#allocation4], 128
    $region61: #{tpu_custom_call.1} parent=1 // pred_fallthru
      _
    %401 = vsyncpa [#allocation3], 1
    %402 = vsyncpa [#allocation6], 1
    %403 = vsyncpa [#allocation9], 1
    %404 = vsyncpa [#allocation4], 1

// kernel: tpu_custom_call.1
$region0: #{tpu_custom_call.1}
  #allocation0 [shape = 'u32[]', space=smem, size = 0x4, offset = 0x4, fixed_abs, tag = 'smem constant byte address 0x4 - core index']
  #allocation1 [shape = 'u32[144,128]{1,0:T(1,128)}', space=vmem, size = 0x12000, scoped, tag = 'internal scratch']
  %s0 = inlined_call_operand.hbm [shape: bf16[16,32], index: 0, kind: input, shape index: {}]
  %s1 = inlined_call_operand.hbm [shape: bf16[32,32], index: 1, kind: input, shape index: {}]
  %s2 = inlined_call_operand.vmem [shape: f32[1,32], index: 2, kind: input, shape index: {}]
  %s3 = inlined_call_operand.hbm [shape: bf16[32,32], index: 3, kind: input, shape index: {}]
  %s4 = inlined_call_operand.vmem [shape: f32[1,32], index: 4, kind: input, shape index: {}]
  %s5 = inlined_call_operand.vmem [shape: bf16[32,32], index: 5, kind: input, shape index: {}]
  %s6 = inlined_call_operand.vmem [shape: f32[1,32], index: 6, kind: input, shape index: {}]
  %s7 = inlined_call_operand.hbm [shape: bf16[32,128], index: 7, kind: input, shape index: {}]
  %s8 = inlined_call_operand.vmem [shape: f32[1,128], index: 8, kind: input, shape index: {}]
  %s9 = inlined_call_operand.hbm [shape: bf16[16,128], index: 9, kind: output, shape index: {}]
  %s10 = sld [smem:[#allocation0]]
  $region62: #{tpu_custom_call.1} parent=0
    _
  %s12 = ssub.s32 1, %s10
  %s13 = scalar_select 0, %s12, %s10
  $region1: #{tpu_custom_call.1} parent=0
    #allocation2 [shape = 'u8[4096]{0}', space=vmem, size = 0x1000, scoped, tag = 'input window, operand 0, single buffered']
    #allocation3 [shape = 's32[1]{0}', space=sflag, size = 0x4, scoped, tag = 'scoped memory for tpu_custom_call.1']
    #allocation4 [shape = 's32[1]{0}', space=sflag, size = 0x4, scoped, tag = 'scoped memory for tpu_custom_call.1']
    #allocation5 [shape = 'u8[8192]{0}', space=vmem, size = 0x2000, scoped, tag = 'input window, operand 1, single buffered']
    #allocation6 [shape = 's32[1]{0}', space=sflag, size = 0x4, scoped, tag = 'scoped memory for tpu_custom_call.1']
    #allocation7 [shape = 'u8[8192]{0}', space=vmem, size = 0x2000, scoped, tag = 'input window, operand 3, single buffered']
    #allocation8 [shape = 'u8[8192]{0}', space=vmem, size = 0x2000, scoped, tag = 'input window, operand 7, single buffered']
    #allocation9 [shape = 's32[1]{0}', space=sflag, size = 0x4, scoped, tag = 'scoped memory for tpu_custom_call.1']
    #allocation10 [shape = 'u8[4096]{0}', space=vmem, size = 0x1000, scoped, tag = 'output window, operand 0, single buffered']
    %14 = vsyncpa [#allocation3], 0
    %15 = vsyncpa [#allocation6], 0
    %16 = vsyncpa [#allocation9], 0
    %17 = vsyncpa [#allocation4], 0
    // Predicated region
    $region2: #{tpu_custom_call.1} parent=1 // pred_check
      _
    $region3: #{tpu_custom_call.1} parent=1 // pred_check_branch
      %19 = sbr.rel (0) target = $region5
    $region4: #{tpu_custom_call.1} parent=1 // pred_region
      %s21 = ssub.s32 128, 128
      %22 = vsyncadd [#allocation3], %s21
      %s23 = sshll.u32 [#allocation2], 4
      %s24 = int_to_ptr.vmem [resolvable:$true] %s23
      %29 = dma.hbm_to_vmem [thread:$0]  %s0, 128, %s24, [#allocation3], 64, 64, 4
    $region5: #{tpu_custom_call.1} parent=1 // pred_fallthru
      _
    // Predicated region
    $region6: #{tpu_custom_call.1} parent=1 // pred_check
      _
    $region7: #{tpu_custom_call.1} parent=1 // pred_check_branch
      %31 = sbr.rel (0) target = $region9
    $region8: #{tpu_custom_call.1} parent=1 // pred_region
      %s33 = ssub.s32 256, 256
      %34 = vsyncadd [#allocation6], %s33
      %s35 = sshll.u32 [#allocation5], 4
      %s36 = int_to_ptr.vmem [resolvable:$true] %s35
      %41 = dma.hbm_to_vmem [thread:$0]  %s1, 256, %s36, [#allocation6], 64, 64, 4
    $region9: #{tpu_custom_call.1} parent=1 // pred_fallthru
      _
    // Predicated region
    $region10: #{tpu_custom_call.1} parent=1 // pred_check
      _
    $region11: #{tpu_custom_call.1} parent=1 // pred_check_branch
      %43 = sbr.rel (0) target = $region13
    $region12: #{tpu_custom_call.1} parent=1 // pred_region
      _
    $region13: #{tpu_custom_call.1} parent=1 // pred_fallthru
      _
    // Predicated region
    $region14: #{tpu_custom_call.1} parent=1 // pred_check
      _
    $region15: #{tpu_custom_call.1} parent=1 // pred_check_branch
      %45 = sbr.rel (0) target = $region17
    $region16: #{tpu_custom_call.1} parent=1 // pred_region
      %s47 = ssub.s32 256, 256
      %48 = vsyncadd [#allocation6], %s47
      %s49 = sshll.u32 [#allocation7], 4
      %s50 = int_to_ptr.vmem [resolvable:$true] %s49
      %55 = dma.hbm_to_vmem [thread:$0]  %s3, 256, %s50, [#allocation6], 64, 64, 4
    $region17: #{tpu_custom_call.1} parent=1 // pred_fallthru
      _
    // Predicated region
    $region18: #{tpu_custom_call.1} parent=1 // pred_check
      _
    $region19: #{tpu_custom_call.1} parent=1 // pred_check_branch
      %57 = sbr.rel (0) target = $region21
    $region20: #{tpu_custom_call.1} parent=1 // pred_region
      _
    $region21: #{tpu_custom_call.1} parent=1 // pred_fallthru
      _
    // Predicated region
    $region22: #{tpu_custom_call.1} parent=1 // pred_check
      _
    $region23: #{tpu_custom_call.1} parent=1 // pred_check_branch
      %59 = sbr.rel (0) target = $region25
    $region24: #{tpu_custom_call.1} parent=1 // pred_region
      _
    $region25: #{tpu_custom_call.1} parent=1 // pred_fallthru
      _
    // Predicated region
    $region26: #{tpu_custom_call.1} parent=1 // pred_check
      _
    $region27: #{tpu_custom_call.1} parent=1 // pred_check_branch
      %61 = sbr.rel (0) target = $region29
    $region28: #{tpu_custom_call.1} parent=1 // pred_region
      _
    $region29: #{tpu_custom_call.1} parent=1 // pred_fallthru
      _
    // Predicated region
    $region30: #{tpu_custom_call.1} parent=1 // pred_check
      _
    $region31: #{tpu_custom_call.1} parent=1 // pred_check_branch
      %63 = sbr.rel (0) target = $region33
    $region32: #{tpu_custom_call.1} parent=1 // pred_region
      %s65 = ssub.s32 256, 256
      %66 = vsyncadd [#allocation9], %s65
      %s67 = sshll.u32 [#allocation8], 4
      %s68 = int_to_ptr.vmem [resolvable:$true] %s67
      %73 = dma.hbm_to_vmem [thread:$0]  %s7, 256, %s68, [#allocation9], 64, 64, 4
    $region33: #{tpu_custom_call.1} parent=1 // pred_fallthru
      _
    // Predicated region
    $region34: #{tpu_custom_call.1} parent=1 // pred_check
      _
    $region35: #{tpu_custom_call.1} parent=1 // pred_check_branch
      %75 = sbr.rel (0) target = $region37
    $region36: #{tpu_custom_call.1} parent=1 // pred_region
      _
    $region37: #{tpu_custom_call.1} parent=1 // pred_fallthru
      _
    // Predicated region
    $region38: #{tpu_custom_call.1} parent=1 // pred_check
      _
    $region39: #{tpu_custom_call.1} parent=1 // pred_check_branch
      %77 = sbr.rel (0) target = $region41
    $region40: #{tpu_custom_call.1} parent=1 // pred_region
      %78 = dma.done [#allocation3], 128
    $region41: #{tpu_custom_call.1} parent=1 // pred_fallthru
      _
    // Predicated region
    $region42: #{tpu_custom_call.1} parent=1 // pred_check
      _
    $region43: #{tpu_custom_call.1} parent=1 // pred_check_branch
      %80 = sbr.rel (0) target = $region45
    $region44: #{tpu_custom_call.1} parent=1 // pred_region
      %81 = dma.done [#allocation6], 256
    $region45: #{tpu_custom_call.1} parent=1 // pred_fallthru
      _
    // Predicated region
    $region46: #{tpu_custom_call.1} parent=1 // pred_check
      _
    $region47: #{tpu_custom_call.1} parent=1 // pred_check_branch
      %83 = sbr.rel (0) target = $region49
    $region48: #{tpu_custom_call.1} parent=1 // pred_region
      %84 = dma.done [#allocation6], 256
    $region49: #{tpu_custom_call.1} parent=1 // pred_fallthru
      _
    // Predicated region
    $region50: #{tpu_custom_call.1} parent=1 // pred_check
      _
    $region51: #{tpu_custom_call.1} parent=1 // pred_check_branch
      %86 = sbr.rel (0) target = $region53
    $region52: #{tpu_custom_call.1} parent=1 // pred_region
      %87 = dma.done [#allocation9], 256
    $region53: #{tpu_custom_call.1} parent=1 // pred_fallthru
      _
    %v89 = vld [vmem:[#allocation2] sm:$0xf]
    %v90 = vld [vmem:[#allocation2 + $0x4] sm:$0xf]
    %v91 = vld [vmem:[#allocation5] sm:$0xf]
    %v92 = vld [vmem:[#allocation5 + $0x4] sm:$0xf]
    %v93 = vld [vmem:[#allocation5 + $0x8] sm:$0xf]
    %v94 = vld [vmem:[#allocation5 + $0xc] sm:$0xf]
    %v95 = vld [vmem:[%s2] sm:$0x1]
    %v97 = vlaneseq
    %v98 = vshrl.u32 %v97, 7
    %v99 = vsub.s32 0, %v98
    %v100 = vrot.slane %v95, %v99
    %v104 = vunpack.c.l.b16 %v89
    %v105 = vunpack.c.l.b16 %v90
    %v106 = vpack.c.b16 %v105, %v104
    %v111 = vunpack.c.l.b16 %v91
    %v112 = vunpack.c.l.b16 %v92
    %v113 = vunpack.c.l.b16 %v93
    %v114 = vunpack.c.l.b16 %v94
    %v115 = vpack.c.b16 %v112, %v111
    %v116 = vpack.c.b16 %v114, %v113
    %vm119 = vcmask 261120
    %v121 = vsel %vm119, %v106, 0
    %123 = vmatprep.subr.bf16.mxu0 0
    %124 = vmatpush1.bf16.msra.mxu0 %v115
    %125 = vmatprep.subr.bf16.mxu0 0
    %126 = vmatpush1.bf16.msra.mxu0 %v116
    %127 = vmatprep.subr.bf16.mxu0 0
    %128 = vmatpush1.bf16.msra.mxu0 0
    %129 = vmatprep.subr.bf16.mxu0 0
    %130 = vmatpush1.bf16.msra.mxu0 0
    %131 = vmatprep.subr.bf16.mxu0 0
    %132 = vmatpush1.bf16.msra.mxu0 0
    %133 = vmatprep.subr.bf16.mxu0 0
    %134 = vmatpush1.bf16.msra.mxu0 0
    %135 = vmatprep.subr.bf16.mxu0 0
    %136 = vmatpush1.bf16.msra.mxu0 0
    %137 = vmatprep.subr.bf16.mxu0 0
    %138 = vmatpush1.bf16.msra.mxu0 0
    %139 = vmatprep.subr.bf16.mxu0 0
    %140 = vmatpush1.bf16.msra.mxu0 0
    %141 = vmatprep.subr.bf16.mxu0 0
    %142 = vmatpush1.bf16.msra.mxu0 0
    %143 = vmatprep.subr.bf16.mxu0 0
    %144 = vmatpush1.bf16.msra.mxu0 0
    %145 = vmatprep.subr.bf16.mxu0 0
    %146 = vmatpush1.bf16.msra.mxu0 0
    %147 = vmatprep.subr.bf16.mxu0 0
    %148 = vmatpush1.bf16.msra.mxu0 0
    %149 = vmatprep.subr.bf16.mxu0 0
    %150 = vmatpush1.bf16.msra.mxu0 0
    %151 = vmatprep.subr.bf16.mxu0 0
    %152 = vmatpush1.bf16.msra.mxu0 0
    %153 = vmatprep.subr.bf16.mxu0 0
    %154 = vmatpush1.bf16.msra.mxu0 0
    %155 = vmatprep.mubr.bf16.mxu0 0
    %156 = vmatmul.mubr.bf16.gmra.mrb[0].mxu0 %v121
    %v157 = vpop.f32.mrb[0].mxu0
    %v158 = vadd.f32 %v100, %v157
    %v159 = vpop.f32.mrb[0].mxu0
    %v160 = vpop.f32.mrb[0].mxu0
    %v161 = vadd.f32 %v100, %v160
    %v162 = vpop.f32.mrb[0].mxu0
    %163 = vdwg.mxu0
    %v164 = vmax.f32 %v158, 0.0
    %v165 = vmax.f32 %v161, 0.0
    %v166 = vpack.c.bf16 %v165, %v164
    %v167 = vld [vmem:[#allocation7] sm:$0xf]
    %v168 = vld [vmem:[#allocation7 + $0x4] sm:$0xf]
    %v169 = vld [vmem:[#allocation7 + $0x8] sm:$0xf]
    %v170 = vld [vmem:[#allocation7 + $0xc] sm:$0xf]
    %v171 = vld [vmem:[%s4] sm:$0x1]
    %v173 = vlaneseq
    %v174 = vshrl.u32 %v173, 7
    %v175 = vsub.s32 0, %v174
    %v176 = vrot.slane %v171, %v175
    %v182 = vunpack.c.l.b16 %v167
    %v183 = vunpack.c.l.b16 %v168
    %v184 = vunpack.c.l.b16 %v169
    %v185 = vunpack.c.l.b16 %v170
    %v186 = vpack.c.b16 %v183, %v182
    %v187 = vpack.c.b16 %v185, %v184
    %v191 = vsel %vm119, %v166, 0
    %193 = vmatprep.subr.bf16.mxu0 0
    %194 = vmatpush1.bf16.msra.mxu0 %v186
    %195 = vmatprep.subr.bf16.mxu0 0
    %196 = vmatpush1.bf16.msra.mxu0 %v187
    %197 = vmatprep.subr.bf16.mxu0 0
    %198 = vmatpush1.bf16.msra.mxu0 0
    %199 = vmatprep.subr.bf16.mxu0 0
    %200 = vmatpush1.bf16.msra.mxu0 0
    %201 = vmatprep.subr.bf16.mxu0 0
    %202 = vmatpush1.bf16.msra.mxu0 0
    %203 = vmatprep.subr.bf16.mxu0 0
    %204 = vmatpush1.bf16.msra.mxu0 0
    %205 = vmatprep.subr.bf16.mxu0 0
    %206 = vmatpush1.bf16.msra.mxu0 0
    %207 = vmatprep.subr.bf16.mxu0 0
    %208 = vmatpush1.bf16.msra.mxu0 0
    %209 = vmatprep.subr.bf16.mxu0 0
    %210 = vmatpush1.bf16.msra.mxu0 0
    %211 = vmatprep.subr.bf16.mxu0 0
    %212 = vmatpush1.bf16.msra.mxu0 0
    %213 = vmatprep.subr.bf16.mxu0 0
    %214 = vmatpush1.bf16.msra.mxu0 0
    %215 = vmatprep.subr.bf16.mxu0 0
    %216 = vmatpush1.bf16.msra.mxu0 0
    %217 = vmatprep.subr.bf16.mxu0 0
    %218 = vmatpush1.bf16.msra.mxu0 0
    %219 = vmatprep.subr.bf16.mxu0 0
    %220 = vmatpush1.bf16.msra.mxu0 0
    %221 = vmatprep.subr.bf16.mxu0 0
    %222 = vmatpush1.bf16.msra.mxu0 0
    %223 = vmatprep.subr.bf16.mxu0 0
    %224 = vmatpush1.bf16.msra.mxu0 0
    %225 = vmatprep.mubr.bf16.mxu0 0
    %226 = vmatmul.mubr.bf16.gmra.mrb[0].mxu0 %v191
    %v227 = vpop.f32.mrb[0].mxu0
    %v228 = vadd.f32 %v176, %v227
    %v229 = vpop.f32.mrb[0].mxu0
    %v230 = vpop.f32.mrb[0].mxu0
    %v231 = vadd.f32 %v176, %v230
    %v232 = vpop.f32.mrb[0].mxu0
    %233 = vdwg.mxu0
    %v234 = vmax.f32 %v228, 0.0
    %v235 = vmax.f32 %v231, 0.0
    %v236 = vpack.c.bf16 %v235, %v234
    %v237 = vld [vmem:[%s5] sm:$0xf]
    %v238 = vld [vmem:[%s5 + $0x4] sm:$0xf]
    %v239 = vld [vmem:[%s5 + $0x8] sm:$0xf]
    %v240 = vld [vmem:[%s5 + $0xc] sm:$0xf]
    %v241 = vld [vmem:[%s6] sm:$0x1]
    %v243 = vlaneseq
    %v244 = vshrl.u32 %v243, 7
    %v245 = vsub.s32 0, %v244
    %v246 = vrot.slane %v241, %v245
    %v252 = vunpack.c.l.b16 %v237
    %v253 = vunpack.c.l.b16 %v238
    %v254 = vunpack.c.l.b16 %v239
    %v255 = vunpack.c.l.b16 %v240
    %v256 = vpack.c.b16 %v253, %v252
    %v257 = vpack.c.b16 %v255, %v254
    %v261 = vsel %vm119, %v236, 0
    %263 = vmatprep.subr.bf16.mxu0 0
    %264 = vmatpush1.bf16.msra.mxu0 %v256
    %265 = vmatprep.subr.bf16.mxu0 0
    %266 = vmatpush1.bf16.msra.mxu0 %v257
    %267 = vmatprep.subr.bf16.mxu0 0
    %268 = vmatpush1.bf16.msra.mxu0 0
    %269 = vmatprep.subr.bf16.mxu0 0
    %270 = vmatpush1.bf16.msra.mxu0 0
    %271 = vmatprep.subr.bf16.mxu0 0
    %272 = vmatpush1.bf16.msra.mxu0 0
    %273 = vmatprep.subr.bf16.mxu0 0
    %274 = vmatpush1.bf16.msra.mxu0 0
    %275 = vmatprep.subr.bf16.mxu0 0
    %276 = vmatpush1.bf16.msra.mxu0 0
    %277 = vmatprep.subr.bf16.mxu0 0
    %278 = vmatpush1.bf16.msra.mxu0 0
    %279 = vmatprep.subr.bf16.mxu0 0
    %280 = vmatpush1.bf16.msra.mxu0 0
    %281 = vmatprep.subr.bf16.mxu0 0
    %282 = vmatpush1.bf16.msra.mxu0 0
    %283 = vmatprep.subr.bf16.mxu0 0
    %284 = vmatpush1.bf16.msra.mxu0 0
    %285 = vmatprep.subr.bf16.mxu0 0
    %286 = vmatpush1.bf16.msra.mxu0 0
    %287 = vmatprep.subr.bf16.mxu0 0
    %288 = vmatpush1.bf16.msra.mxu0 0
    %289 = vmatprep.subr.bf16.mxu0 0
    %290 = vmatpush1.bf16.msra.mxu0 0
    %291 = vmatprep.subr.bf16.mxu0 0
    %292 = vmatpush1.bf16.msra.mxu0 0
    %293 = vmatprep.subr.bf16.mxu0 0
    %294 = vmatpush1.bf16.msra.mxu0 0
    %295 = vmatprep.mubr.bf16.mxu0 0
    %296 = vmatmul.mubr.bf16.gmra.mrb[0].mxu0 %v261
    %v297 = vpop.f32.mrb[0].mxu0
    %v298 = vadd.f32 %v246, %v297
    %v299 = vpop.f32.mrb[0].mxu0
    %v300 = vpop.f32.mrb[0].mxu0
    %v301 = vadd.f32 %v246, %v300
    %v302 = vpop.f32.mrb[0].mxu0
    %303 = vdwg.mxu0
    %v304 = vunpack.c.l.bf16 %v166
    %v305 = vunpack.c.h.bf16 %v166
    %v306 = vadd.f32 %v304, %v298
    %v307 = vadd.f32 %v305, %v301
    %v308 = vpack.c.bf16 %v307, %v306
    %v309 = vld [vmem:[#allocation8] sm:$0xf]
    %v310 = vld [vmem:[#allocation8 + $0x4] sm:$0xf]
    %v311 = vld [vmem:[#allocation8 + $0x8] sm:$0xf]
    %v312 = vld [vmem:[#allocation8 + $0xc] sm:$0xf]
    %v313 = vld [vmem:[%s8] sm:$0x1]
    %v315 = vlaneseq
    %v316 = vshrl.u32 %v315, 7
    %v317 = vsub.s32 0, %v316
    %v318 = vrot.slane %v313, %v317
    %v324 = vunpack.c.l.b16 %v309
    %v325 = vunpack.c.l.b16 %v310
    %v326 = vunpack.c.l.b16 %v311
    %v327 = vunpack.c.l.b16 %v312
    %v328 = vpack.c.b16 %v325, %v324
    %v329 = vpack.c.b16 %v327, %v326
    %v333 = vsel %vm119, %v308, 0
    %335 = vmatprep.subr.bf16.mxu0 0
    %336 = vmatpush1.bf16.msra.mxu0 %v328
    %337 = vmatprep.subr.bf16.mxu0 0
    %338 = vmatpush1.bf16.msra.mxu0 %v329
    %339 = vmatprep.subr.bf16.mxu0 0
    %340 = vmatpush1.bf16.msra.mxu0 0
    %341 = vmatprep.subr.bf16.mxu0 0
    %342 = vmatpush1.bf16.msra.mxu0 0
    %343 = vmatprep.subr.bf16.mxu0 0
    %344 = vmatpush1.bf16.msra.mxu0 0
    %345 = vmatprep.subr.bf16.mxu0 0
    %346 = vmatpush1.bf16.msra.mxu0 0
    %347 = vmatprep.subr.bf16.mxu0 0
    %348 = vmatpush1.bf16.msra.mxu0 0
    %349 = vmatprep.subr.bf16.mxu0 0
    %350 = vmatpush1.bf16.msra.mxu0 0
    %351 = vmatprep.subr.bf16.mxu0 0
    %352 = vmatpush1.bf16.msra.mxu0 0
    %353 = vmatprep.subr.bf16.mxu0 0
    %354 = vmatpush1.bf16.msra.mxu0 0
    %355 = vmatprep.subr.bf16.mxu0 0
    %356 = vmatpush1.bf16.msra.mxu0 0
    %357 = vmatprep.subr.bf16.mxu0 0
    %358 = vmatpush1.bf16.msra.mxu0 0
    %359 = vmatprep.subr.bf16.mxu0 0
    %360 = vmatpush1.bf16.msra.mxu0 0
    %361 = vmatprep.subr.bf16.mxu0 0
    %362 = vmatpush1.bf16.msra.mxu0 0
    %363 = vmatprep.subr.bf16.mxu0 0
    %364 = vmatpush1.bf16.msra.mxu0 0
    %365 = vmatprep.subr.bf16.mxu0 0
    %366 = vmatpush1.bf16.msra.mxu0 0
    %367 = vmatprep.mubr.bf16.mxu0 0
    %368 = vmatmul.mubr.bf16.gmra.mrb[0].mxu0 %v333
    %v369 = vpop.f32.mrb[0].mxu0
    %v370 = vadd.f32 %v318, %v369
    %v371 = vpop.f32.mrb[0].mxu0
    %v372 = vpop.f32.mrb[0].mxu0
    %v373 = vadd.f32 %v318, %v372
    %v374 = vpop.f32.mrb[0].mxu0
    %375 = vdwg.mxu0
    %v376 = vpack.c.bf16 %v373, %v370
    %v378 = vunpack.c.l.b16 %v376
    %v379 = vunpack.c.h.b16 %v376
    %v380 = vpack.c.b16 %v378, %v378
    %v381 = vpack.c.b16 %v379, %v379
    %384 = vst [vmem:[#allocation10] sm:$0xf] %v380
    %385 = vst [vmem:[#allocation10 + $0x4] sm:$0xf] %v381
    // Predicated region
    $region54: #{tpu_custom_call.1} parent=1 // pred_check
      _
    $region55: #{tpu_custom_call.1} parent=1 // pred_check_branch
      %387 = sbr.rel (0) target = $region57
    $region56: #{tpu_custom_call.1} parent=1 // pred_region
      %s389 = ssub.s32 128, 128
      %390 = vsyncadd [#allocation4], %s389
      %s391 = sshll.u32 [#allocation10], 4
      %s392 = int_to_ptr.vmem [resolvable:$true] %s391
      %397 = dma.vmem_to_hbm [thread:$0]  %s392, 128, %s9, [#allocation4], 64, 64, 4
    $region57: #{tpu_custom_call.1} parent=1 // pred_fallthru
      _
    // Predicated region
    $region58: #{tpu_custom_call.1} parent=1 // pred_check
      _
    $region59: #{tpu_custom_call.1} parent=1 // pred_check_branch
      %399 = sbr.rel (0) target = $region61
    $region60: #{tpu_custom_call.1} parent=1 // pred_region
      %400 = dma.done [#allocation4], 128
    $region61: #{tpu_custom_call.1} parent=1 // pred_fallthru
      _
    %401 = vsyncpa [#allocation3], 1
    %402 = vsyncpa [#allocation6], 1
    %403 = vsyncpa [#allocation9], 1
    %404 = vsyncpa [#allocation4], 1

</llo_original>
